<compile_context>
chip_gen: v7x
topology: tpu7x:2x2x1
jax: 0.10.0
libtpu: 0.0.40
codegen_flags: <defaults>
</compile_context>

<pallas_src>
import jax
import jax.numpy as jnp
from jax.experimental import pallas as pl
from jax.experimental.pallas import tpu as pltpu

# act_format: int8-like block-floating-point mantissa (feature_dict says 'int8')
MANT_BITS = 8


def _bfp_fake_quant(sv):
    # Block-floating-point fake quant: shared exponent per row over the head
    # dim (block = full last dim), mantissa rounded to MANT_BITS signed bits.
    # Quant math kept in f32 (v5e VPU/EUP have no bf16); divide replaced by a
    # multiply with the inverse scale so the hot path stays on the VPU.
    # TODO(synk): BFPQuantFunction source not provided; this is a standard BFP
    # quantize-dequantize for the declared 'int8' act format. Deltas to verify
    # against the torch op: jnp.round is half-to-even (torch.round is
    # half-away-from-zero), and ceil(log2) clips the block max by 1 LSB when
    # max_abs is an exact power of two (some impls use floor(log2)+1 or read
    # the exponent field from the float bits).
    max_abs = jnp.max(jnp.abs(sv), axis=-1, keepdims=True)
    shared_exp = jnp.ceil(jnp.log2(jnp.maximum(max_abs, 2.0 ** -126)))
    inv_scale = jnp.exp2((MANT_BITS - 1.0) - shared_exp)   # per-row, cheap
    scale = jnp.exp2(shared_exp - (MANT_BITS - 1.0))
    qmax = 2.0 ** (MANT_BITS - 1) - 1.0
    q = jnp.clip(jnp.round(sv * inv_scale), -qmax - 1.0, qmax)
    return q * scale


def _round_up(x, m):
    return (x + m - 1) // m * m


def _padded_block_bytes(shape, dtype):
    # VMEM footprint of one block including tiled-layout padding: last dim pads
    # to 128 lanes, second-to-last to the sublane packing of the dtype.
    itemsize = jnp.dtype(dtype).itemsize
    sublane = {4: 8, 2: 16, 1: 32}.get(itemsize, 8)
    dims = list(shape)
    if dims:
        dims[-1] = _round_up(dims[-1], 128)
    if len(dims) >= 2:
        dims[-2] = _round_up(dims[-2], sublane)
    n = itemsize
    for d in dims:
        n *= d
    return n


def _vmem_ceiling_bytes():
    # Per-core VMEM ceiling from the hardware (64 MiB on v7x, 128 MiB on
    # v5e/v6e) with ~25% headroom for compiler scratch / semaphores, instead of
    # requesting 100% of physical VMEM.
    try:
        cap = int(pltpu.get_tpu_info().vmem_capacity_bytes)
    except Exception:
        cap = 64 * 1024 * 1024   # assume the smallest (v7x) if the query fails
    return cap * 3 // 4


def _pick_query_tile(n, b):
    # Keep the query tile at <= 128 rows so the streamed s block stays ~1 MiB
    # even for ragged ViT sequence lengths (197/577/1369, ...). The grid uses
    # cdiv; Pallas masks the partial last block (OOB reads are harmless since
    # the quant epilogue is per-row; OOB writes are dropped).
    tq = n if n <= 128 else 128
    # v7x shards the parallel grid axes across its 2 TensorCores: make sure a
    # B=1 call still yields >= 2 grid steps.
    if b == 1 and pl.cdiv(n, tq) == 1 and tq % 16 == 0:
        tq //= 2
    return tq


def sv_mul_kernel(s_ref, v_ref, o_ref):
    # s_ref: (H, TQ, N) bf16, v_ref: (H, N, D) bf16, o_ref: (TQ, H*D)
    # One (batch, query-tile) pair per grid step; all heads fused so the output
    # tile is lane-dense over C = H*D (no trailing transpose/reshape HBM pass).
    H = s_ref.shape[0]
    D = v_ref.shape[-1]

    def one_head(h):
        # bf16 x bf16 -> f32 MXU matmul, then per-head f32 BFP quant epilogue.
        sv = jnp.dot(s_ref[h], v_ref[h], preferred_element_type=jnp.float32)
        return _bfp_fake_quant(sv).astype(o_ref.dtype)

    # Group heads so each store covers >= 128 lanes (D=64 -> pairs, D=32 ->
    # quads): full-width unmasked vst instead of D-wide masked stores, while
    # bounding live f32 temporaries to one group at a time.
    group = 1 if D >= 128 else max(1, min(H, 128 // D))
    h = 0
    while h < H:
        gsz = min(group, H - h)
        if gsz == 1:
            tile = one_head(h)
        else:
            tile = jnp.concatenate([one_head(h + i) for i in range(gsz)],
                                   axis=-1)
        o_ref[:, h * D:(h + gsz) * D] = tile
        h += gsz


def hmq_mul_sv(s, v, x, out_dtype=jnp.bfloat16):
    # Call contract: s and v should already live in HBM as bf16 (the op is
    # bound by streaming B*H*N^2 bytes of s). The casts below are no-ops for
    # bf16 callers and fuse into the upstream producer under jit.
    # TODO(synk): an 8-bit scores path (fp8 e4m3 on v7x, int8 on v5e/v6e) would
    # halve the s HBM stream again, but needs the upstream softmax to emit
    # quantized scores plus a per-tile scale; not wired here.
    B, H, N, _ = s.shape
    D = v.shape[-1]
    Bx, Nx, C = x.shape
    assert (B, N) == (Bx, Nx) and C == H * D

    if s.dtype != jnp.bfloat16:
        s = s.astype(jnp.bfloat16)
    if v.dtype != jnp.bfloat16:
        v = v.astype(jnp.bfloat16)

    TQ = _pick_query_tile(N, B)

    # VMEM accounting with layout padding; shrink TQ if the double-buffered
    # blocks would not fit the per-core ceiling (pathological N only).
    ceiling = _vmem_ceiling_bytes()

    def _blocks(tq):
        return (_padded_block_bytes((H, tq, N), s.dtype),
                _padded_block_bytes((H, N, D), v.dtype),
                _padded_block_bytes((tq, C), out_dtype))

    s_blk, v_blk, o_blk = _blocks(TQ)
    while 2 * (s_blk + v_blk + o_blk) > ceiling and TQ > 8 and TQ % 16 == 0:
        TQ //= 2
        s_blk, v_blk, o_blk = _blocks(TQ)

    grid = (B, pl.cdiv(N, TQ))
    vmem_needed = 2 * (s_blk + v_blk + o_blk)
    vmem_limit = int(min(max(2 * vmem_needed, 32 * 1024 * 1024), ceiling))

    out = pl.pallas_call(
        sv_mul_kernel,
        out_shape=jax.ShapeDtypeStruct((B, N, C), out_dtype),
        grid_spec=pltpu.PrefetchScalarGridSpec(
            num_scalar_prefetch=0,
            grid=grid,
            in_specs=[
                # scores: all heads, one query tile (the only streamed operand).
                # TODO(synk): if an xprof trace on v5e shows exposed DMA at
                # step boundaries, add pipeline_mode=pl.Buffered(3) here
                # (re-check the VMEM budget before enabling on v7x).
                pl.BlockSpec((pl.Squeezed(), H, TQ, N),
                             lambda b, q: (b, 0, q, 0)),
                # values: all heads, full; revisited across query tiles
                # (same block index -> no re-DMA).
                pl.BlockSpec((pl.Squeezed(), H, N, D),
                             lambda b, q: (b, 0, 0, 0)),
            ],
            # lane-dense (TQ, C) output slab: head-merge fused into the kernel.
            out_specs=pl.BlockSpec((pl.Squeezed(), TQ, C),
                                   lambda b, q: (b, q, 0)),
        ),
        compiler_params=pltpu.CompilerParams(
            dimension_semantics=("parallel", "parallel"),
            vmem_limit_bytes=vmem_limit),
    )(s, v)

    return out  # already (B, N, C) == sv.transpose(1, 2).reshape(B, N, C)


def hmq_mul_sv_ref(s, v, x, out_dtype=jnp.bfloat16):
    B, H, N, _ = s.shape
    D = v.shape[-1]
    C = H * D
    sv = jnp.einsum("bhij,bhjd->bhid",
                    s.astype(jnp.bfloat16), v.astype(jnp.bfloat16),
                    preferred_element_type=jnp.float32)
    svq = _bfp_fake_quant(sv)
    return jnp.transpose(svq, (0, 2, 1, 3)).reshape(B, N, C).astype(out_dtype)


# NOTE: mp.parse_layer / mp.parse_ops in the PyTorch module are model-parser
# bookkeeping with no numerical effect; they are intentionally not translated.

if __name__ == "__main__":
    def run_case(B, H, N, D, seed=0):
        C = H * D
        key = jax.random.PRNGKey(seed)
        ks, kv, _ = jax.random.split(key, 3)
        # Upstream activations assumed bf16 (halves HBM traffic into the kernel).
        s = jax.random.normal(ks, (B, H, N, N), dtype=jnp.float32).astype(jnp.bfloat16)
        v = jax.random.normal(kv, (B, H, N, D), dtype=jnp.float32).astype(jnp.bfloat16)
        x = jnp.zeros((B, N, C), dtype=jnp.bfloat16)  # only its shape is used

        out = jax.block_until_ready(hmq_mul_sv(s, v, x))
        ref = hmq_mul_sv_ref(s, v, x)
        assert out.shape == (B, N, C), out.shape

        # Tolerance: allow at most one BFP LSB per element (accumulation-order
        # ulps in the matmul can, at worst, flip one round()).
        sv = jnp.einsum("bhij,bhjd->bhid",
                        s.astype(jnp.bfloat16), v.astype(jnp.bfloat16),
                        preferred_element_type=jnp.float32)
        max_abs = jnp.max(jnp.abs(sv), axis=-1, keepdims=True)
        lsb = jnp.exp2(jnp.ceil(jnp.log2(jnp.maximum(max_abs, 2.0 ** -126)))
                       - (MANT_BITS - 1.0))
        tol = jnp.transpose(jnp.broadcast_to(lsb, sv.shape),
                            (0, 2, 1, 3)).reshape(B, N, C)
        err = jnp.abs(out.astype(jnp.float32) - ref.astype(jnp.float32))
        assert bool(jnp.all(err <= tol + 1e-6)), (
            f"mismatch vs reference, max err {float(jnp.max(err))}")

    run_case(2, 4, 8, 8)       # tiny smoke test (matches module's small shapes)
    run_case(1, 4, 128, 64)    # B=1 occupancy path: TQ halves to 64 -> grid (1,2)
    run_case(1, 4, 197, 32)    # ragged ViT N: cdiv grid + masked partial block
    print("KERNEL_OK")
</pallas_src>

<mosaic_0001>
module attributes {stable_mosaic.version = 11 : i64} {
  func.func @sv_mul_kernel(%arg0: i32, %arg1: i32, %arg2: memref<1x4x8x8xbf16, #tpu.memory_space<vmem>>, %arg3: memref<1x4x8x8xbf16, #tpu.memory_space<vmem>>, %arg4: memref<1x8x32xbf16, #tpu.memory_space<vmem>>) attributes {dimension_semantics = [#tpu.dimension_semantics<parallel>, #tpu.dimension_semantics<parallel>], iteration_bounds = array<i64: 2, 1>, scalar_prefetch = 0 : i64, scratch_operands = 0 : i64, tpu.core_type = #tpu.core_type<tc>, window_params = [{transform_indices = @transform_0, window_bounds = array<i64: 1, 4, 8, 8>}, {transform_indices = @transform_1, window_bounds = array<i64: 1, 4, 8, 8>}, {transform_indices = @transform_2, window_bounds = array<i64: 1, 8, 32>}]} {
    %c0 = arith.constant 0 : index
    %c0_0 = arith.constant 0 : index
    %c0_1 = arith.constant 0 : index
    %c0_2 = arith.constant 0 : index
    %0 = vector.load %arg2[%c0, %c0_0, %c0_1, %c0_2] : memref<1x4x8x8xbf16, #tpu.memory_space<vmem>>, vector<1x1x8x8xbf16>
    %1 = vector.shape_cast %0 : vector<1x1x8x8xbf16> to vector<8x8xbf16>
    %c0_3 = arith.constant 0 : index
    %c0_4 = arith.constant 0 : index
    %c0_5 = arith.constant 0 : index
    %c0_6 = arith.constant 0 : index
    %2 = vector.load %arg3[%c0_3, %c0_4, %c0_5, %c0_6] : memref<1x4x8x8xbf16, #tpu.memory_space<vmem>>, vector<1x1x8x8xbf16>
    %3 = vector.shape_cast %2 : vector<1x1x8x8xbf16> to vector<8x8xbf16>
    %cst = arith.constant dense<0.000000e+00> : vector<8x8xf32>
    %4 = tpu.matmul %1, %3, %cst {dimension_numbers = #tpu.dot_dimension_numbers<[1], [0], [0], [1], [0, 0, 1, 1], [], []>} : vector<8x8xbf16>, vector<8x8xbf16>, vector<8x8xf32> -> vector<8x8xf32>
    %5 = math.absf %4 : vector<8x8xf32>
    %cst_7 = arith.constant dense<0xFF800000> : vector<8xf32>
    %6 = vector.multi_reduction <maximumf>, %5, %cst_7 [1] : vector<8x8xf32> to vector<8xf32>
    %7 = vector.shape_cast %6 : vector<8xf32> to vector<8x1xf32>
    %cst_8 = arith.constant 1.17549435E-38 : f32
    %8 = vector.broadcast %cst_8 : f32 to vector<8x1xf32>
    %9 = arith.maximumf %7, %8 : vector<8x1xf32>
    %10 = math.log %9 : vector<8x1xf32>
    %cst_9 = arith.constant 2.000000e+00 : f32
    %11 = math.log %cst_9 : f32
    %12 = vector.broadcast %11 : f32 to vector<8x1xf32>
    %13 = arith.divf %10, %12 : vector<8x1xf32>
    %14 = math.ceil %13 : vector<8x1xf32>
    %cst_10 = arith.constant 7.000000e+00 : f32
    %15 = vector.broadcast %cst_10 : f32 to vector<8x1xf32>
    %16 = arith.subf %15, %14 : vector<8x1xf32>
    %17 = math.exp2 %16 : vector<8x1xf32>
    %cst_11 = arith.constant 7.000000e+00 : f32
    %18 = vector.broadcast %cst_11 : f32 to vector<8x1xf32>
    %19 = arith.subf %14, %18 : vector<8x1xf32>
    %20 = math.exp2 %19 : vector<8x1xf32>
    %21 = vector.broadcast %17 : vector<8x1xf32> to vector<8x8xf32>
    %22 = arith.mulf %4, %21 : vector<8x8xf32>
    %23 = math.roundeven %22 : vector<8x8xf32>
    %cst_12 = arith.constant -1.280000e+02 : f32
    %cst_13 = arith.constant 1.270000e+02 : f32
    %24 = vector.broadcast %cst_12 : f32 to vector<8x8xf32>
    %25 = arith.maximumf %24, %23 : vector<8x8xf32>
    %26 = vector.broadcast %cst_13 : f32 to vector<8x8xf32>
    %27 = arith.minimumf %26, %25 : vector<8x8xf32>
    %28 = vector.broadcast %20 : vector<8x1xf32> to vector<8x8xf32>
    %29 = arith.mulf %27, %28 : vector<8x8xf32>
    %30 = arith.truncf %29 : vector<8x8xf32> to vector<8x8xbf16>
    %c0_14 = arith.constant 0 : index
    %c1 = arith.constant 1 : index
    %c0_15 = arith.constant 0 : index
    %c0_16 = arith.constant 0 : index
    %31 = vector.load %arg2[%c0_14, %c1, %c0_15, %c0_16] : memref<1x4x8x8xbf16, #tpu.memory_space<vmem>>, vector<1x1x8x8xbf16>
    %32 = vector.shape_cast %31 : vector<1x1x8x8xbf16> to vector<8x8xbf16>
    %c0_17 = arith.constant 0 : index
    %c1_18 = arith.constant 1 : index
    %c0_19 = arith.constant 0 : index
    %c0_20 = arith.constant 0 : index
    %33 = vector.load %arg3[%c0_17, %c1_18, %c0_19, %c0_20] : memref<1x4x8x8xbf16, #tpu.memory_space<vmem>>, vector<1x1x8x8xbf16>
    %34 = vector.shape_cast %33 : vector<1x1x8x8xbf16> to vector<8x8xbf16>
    %cst_21 = arith.constant dense<0.000000e+00> : vector<8x8xf32>
    %35 = tpu.matmul %32, %34, %cst_21 {dimension_numbers = #tpu.dot_dimension_numbers<[1], [0], [0], [1], [0, 0, 1, 1], [], []>} : vector<8x8xbf16>, vector<8x8xbf16>, vector<8x8xf32> -> vector<8x8xf32>
    %36 = math.absf %35 : vector<8x8xf32>
    %cst_22 = arith.constant dense<0xFF800000> : vector<8xf32>
    %37 = vector.multi_reduction <maximumf>, %36, %cst_22 [1] : vector<8x8xf32> to vector<8xf32>
    %38 = vector.shape_cast %37 : vector<8xf32> to vector<8x1xf32>
    %cst_23 = arith.constant 1.17549435E-38 : f32
    %39 = vector.broadcast %cst_23 : f32 to vector<8x1xf32>
    %40 = arith.maximumf %38, %39 : vector<8x1xf32>
    %41 = math.log %40 : vector<8x1xf32>
    %cst_24 = arith.constant 2.000000e+00 : f32
    %42 = math.log %cst_24 : f32
    %43 = vector.broadcast %42 : f32 to vector<8x1xf32>
    %44 = arith.divf %41, %43 : vector<8x1xf32>
    %45 = math.ceil %44 : vector<8x1xf32>
    %cst_25 = arith.constant 7.000000e+00 : f32
    %46 = vector.broadcast %cst_25 : f32 to vector<8x1xf32>
    %47 = arith.subf %46, %45 : vector<8x1xf32>
    %48 = math.exp2 %47 : vector<8x1xf32>
    %cst_26 = arith.constant 7.000000e+00 : f32
    %49 = vector.broadcast %cst_26 : f32 to vector<8x1xf32>
    %50 = arith.subf %45, %49 : vector<8x1xf32>
    %51 = math.exp2 %50 : vector<8x1xf32>
    %52 = vector.broadcast %48 : vector<8x1xf32> to vector<8x8xf32>
    %53 = arith.mulf %35, %52 : vector<8x8xf32>
    %54 = math.roundeven %53 : vector<8x8xf32>
    %cst_27 = arith.constant -1.280000e+02 : f32
    %cst_28 = arith.constant 1.270000e+02 : f32
    %55 = vector.broadcast %cst_27 : f32 to vector<8x8xf32>
    %56 = arith.maximumf %55, %54 : vector<8x8xf32>
    %57 = vector.broadcast %cst_28 : f32 to vector<8x8xf32>
    %58 = arith.minimumf %57, %56 : vector<8x8xf32>
    %59 = vector.broadcast %51 : vector<8x1xf32> to vector<8x8xf32>
    %60 = arith.mulf %58, %59 : vector<8x8xf32>
    %61 = arith.truncf %60 : vector<8x8xf32> to vector<8x8xbf16>
    %c0_29 = arith.constant 0 : index
    %c2 = arith.constant 2 : index
    %c0_30 = arith.constant 0 : index
    %c0_31 = arith.constant 0 : index
    %62 = vector.load %arg2[%c0_29, %c2, %c0_30, %c0_31] : memref<1x4x8x8xbf16, #tpu.memory_space<vmem>>, vector<1x1x8x8xbf16>
    %63 = vector.shape_cast %62 : vector<1x1x8x8xbf16> to vector<8x8xbf16>
    %c0_32 = arith.constant 0 : index
    %c2_33 = arith.constant 2 : index
    %c0_34 = arith.constant 0 : index
    %c0_35 = arith.constant 0 : index
    %64 = vector.load %arg3[%c0_32, %c2_33, %c0_34, %c0_35] : memref<1x4x8x8xbf16, #tpu.memory_space<vmem>>, vector<1x1x8x8xbf16>
    %65 = vector.shape_cast %64 : vector<1x1x8x8xbf16> to vector<8x8xbf16>
    %cst_36 = arith.constant dense<0.000000e+00> : vector<8x8xf32>
    %66 = tpu.matmul %63, %65, %cst_36 {dimension_numbers = #tpu.dot_dimension_numbers<[1], [0], [0], [1], [0, 0, 1, 1], [], []>} : vector<8x8xbf16>, vector<8x8xbf16>, vector<8x8xf32> -> vector<8x8xf32>
    %67 = math.absf %66 : vector<8x8xf32>
    %cst_37 = arith.constant dense<0xFF800000> : vector<8xf32>
    %68 = vector.multi_reduction <maximumf>, %67, %cst_37 [1] : vector<8x8xf32> to vector<8xf32>
    %69 = vector.shape_cast %68 : vector<8xf32> to vector<8x1xf32>
    %cst_38 = arith.constant 1.17549435E-38 : f32
    %70 = vector.broadcast %cst_38 : f32 to vector<8x1xf32>
    %71 = arith.maximumf %69, %70 : vector<8x1xf32>
    %72 = math.log %71 : vector<8x1xf32>
    %cst_39 = arith.constant 2.000000e+00 : f32
    %73 = math.log %cst_39 : f32
    %74 = vector.broadcast %73 : f32 to vector<8x1xf32>
    %75 = arith.divf %72, %74 : vector<8x1xf32>
    %76 = math.ceil %75 : vector<8x1xf32>
    %cst_40 = arith.constant 7.000000e+00 : f32
    %77 = vector.broadcast %cst_40 : f32 to vector<8x1xf32>
    %78 = arith.subf %77, %76 : vector<8x1xf32>
    %79 = math.exp2 %78 : vector<8x1xf32>
    %cst_41 = arith.constant 7.000000e+00 : f32
    %80 = vector.broadcast %cst_41 : f32 to vector<8x1xf32>
    %81 = arith.subf %76, %80 : vector<8x1xf32>
    %82 = math.exp2 %81 : vector<8x1xf32>
    %83 = vector.broadcast %79 : vector<8x1xf32> to vector<8x8xf32>
    %84 = arith.mulf %66, %83 : vector<8x8xf32>
    %85 = math.roundeven %84 : vector<8x8xf32>
    %cst_42 = arith.constant -1.280000e+02 : f32
    %cst_43 = arith.constant 1.270000e+02 : f32
    %86 = vector.broadcast %cst_42 : f32 to vector<8x8xf32>
    %87 = arith.maximumf %86, %85 : vector<8x8xf32>
    %88 = vector.broadcast %cst_43 : f32 to vector<8x8xf32>
    %89 = arith.minimumf %88, %87 : vector<8x8xf32>
    %90 = vector.broadcast %82 : vector<8x1xf32> to vector<8x8xf32>
    %91 = arith.mulf %89, %90 : vector<8x8xf32>
    %92 = arith.truncf %91 : vector<8x8xf32> to vector<8x8xbf16>
    %c0_44 = arith.constant 0 : index
    %c3 = arith.constant 3 : index
    %c0_45 = arith.constant 0 : index
    %c0_46 = arith.constant 0 : index
    %93 = vector.load %arg2[%c0_44, %c3, %c0_45, %c0_46] : memref<1x4x8x8xbf16, #tpu.memory_space<vmem>>, vector<1x1x8x8xbf16>
    %94 = vector.shape_cast %93 : vector<1x1x8x8xbf16> to vector<8x8xbf16>
    %c0_47 = arith.constant 0 : index
    %c3_48 = arith.constant 3 : index
    %c0_49 = arith.constant 0 : index
    %c0_50 = arith.constant 0 : index
    %95 = vector.load %arg3[%c0_47, %c3_48, %c0_49, %c0_50] : memref<1x4x8x8xbf16, #tpu.memory_space<vmem>>, vector<1x1x8x8xbf16>
    %96 = vector.shape_cast %95 : vector<1x1x8x8xbf16> to vector<8x8xbf16>
    %cst_51 = arith.constant dense<0.000000e+00> : vector<8x8xf32>
    %97 = tpu.matmul %94, %96, %cst_51 {dimension_numbers = #tpu.dot_dimension_numbers<[1], [0], [0], [1], [0, 0, 1, 1], [], []>} : vector<8x8xbf16>, vector<8x8xbf16>, vector<8x8xf32> -> vector<8x8xf32>
    %98 = math.absf %97 : vector<8x8xf32>
    %cst_52 = arith.constant dense<0xFF800000> : vector<8xf32>
    %99 = vector.multi_reduction <maximumf>, %98, %cst_52 [1] : vector<8x8xf32> to vector<8xf32>
    %100 = vector.shape_cast %99 : vector<8xf32> to vector<8x1xf32>
    %cst_53 = arith.constant 1.17549435E-38 : f32
    %101 = vector.broadcast %cst_53 : f32 to vector<8x1xf32>
    %102 = arith.maximumf %100, %101 : vector<8x1xf32>
    %103 = math.log %102 : vector<8x1xf32>
    %cst_54 = arith.constant 2.000000e+00 : f32
    %104 = math.log %cst_54 : f32
    %105 = vector.broadcast %104 : f32 to vector<8x1xf32>
    %106 = arith.divf %103, %105 : vector<8x1xf32>
    %107 = math.ceil %106 : vector<8x1xf32>
    %cst_55 = arith.constant 7.000000e+00 : f32
    %108 = vector.broadcast %cst_55 : f32 to vector<8x1xf32>
    %109 = arith.subf %108, %107 : vector<8x1xf32>
    %110 = math.exp2 %109 : vector<8x1xf32>
    %cst_56 = arith.constant 7.000000e+00 : f32
    %111 = vector.broadcast %cst_56 : f32 to vector<8x1xf32>
    %112 = arith.subf %107, %111 : vector<8x1xf32>
    %113 = math.exp2 %112 : vector<8x1xf32>
    %114 = vector.broadcast %110 : vector<8x1xf32> to vector<8x8xf32>
    %115 = arith.mulf %97, %114 : vector<8x8xf32>
    %116 = math.roundeven %115 : vector<8x8xf32>
    %cst_57 = arith.constant -1.280000e+02 : f32
    %cst_58 = arith.constant 1.270000e+02 : f32
    %117 = vector.broadcast %cst_57 : f32 to vector<8x8xf32>
    %118 = arith.maximumf %117, %116 : vector<8x8xf32>
    %119 = vector.broadcast %cst_58 : f32 to vector<8x8xf32>
    %120 = arith.minimumf %119, %118 : vector<8x8xf32>
    %121 = vector.broadcast %113 : vector<8x1xf32> to vector<8x8xf32>
    %122 = arith.mulf %120, %121 : vector<8x8xf32>
    %123 = arith.truncf %122 : vector<8x8xf32> to vector<8x8xbf16>
    %124 = tpu.concatenate %30, %61, %92, %123 in 1 : vector<8x8xbf16>, vector<8x8xbf16>, vector<8x8xbf16>, vector<8x8xbf16> -> vector<8x32xbf16>
    %c0_59 = arith.constant 0 : index
    %c0_60 = arith.constant 0 : index
    %c0_61 = arith.constant 0 : index
    %125 = vector.load %arg4[%c0_59, %c0_60, %c0_61] : memref<1x8x32xbf16, #tpu.memory_space<vmem>>, vector<1x8x32xbf16>
    %126 = vector.shape_cast %125 : vector<1x8x32xbf16> to vector<8x32xbf16>
    %127 = vector.shape_cast %124 : vector<8x32xbf16> to vector<1x8x32xbf16>
    tpu.vector_store %arg4[%c0_59, %c0_60, %c0_61], %127 {strides = array<i32>} : memref<1x8x32xbf16, #tpu.memory_space<vmem>>, vector<1x8x32xbf16>,
    return
  }
  func.func @transform_0(%arg0: i32, %arg1: i32) -> (i32, i32, i32, i32) {
    %c0_i32 = arith.constant 0 : i32
    %c0_i32_0 = arith.constant 0 : i32
    %c0_i32_1 = arith.constant 0 : i32
    return %arg0, %c0_i32, %arg1, %c0_i32_0 : i32, i32, i32, i32
  }
  func.func @transform_1(%arg0: i32, %arg1: i32) -> (i32, i32, i32, i32) {
    %c0_i32 = arith.constant 0 : i32
    %c0_i32_0 = arith.constant 0 : i32
    %c0_i32_1 = arith.constant 0 : i32
    %c0_i32_2 = arith.constant 0 : i32
    return %arg0, %c0_i32, %c0_i32_0, %c0_i32_1 : i32, i32, i32, i32
  }
  func.func @transform_2(%arg0: i32, %arg1: i32) -> (i32, i32, i32) {
    %c0_i32 = arith.constant 0 : i32
    %c0_i32_0 = arith.constant 0 : i32
    return %arg0, %arg1, %c0_i32 : i32, i32, i32
  }
}

</mosaic_0001>

<llo_original>
// kernel: tpu_custom_call.1
$region0: #{tpu_custom_call.1}
  #allocation0 [shape = 'u32[]', space=smem, size = 0x4, offset = 0x4, fixed_abs, tag = 'smem constant byte address 0x4 - core index']
  #allocation1 [shape = 'u32[144,128]{1,0:T(1,128)}', space=vmem, size = 0x12000, scoped, tag = 'internal scratch']
  %s0 = inlined_call_operand.hbm [shape: bf16[2,4,8,8], index: 0, kind: input, shape index: {}]
  %s1 = inlined_call_operand.hbm [shape: bf16[2,4,8,8], index: 1, kind: input, shape index: {}]
  %s2 = inlined_call_operand.hbm [shape: bf16[2,8,32], index: 2, kind: output, shape index: {}]
  %s3 = sld [smem:[#allocation0]]
  $region49: #{tpu_custom_call.1} parent=0
    _
  %s5 = ssub.s32 1, %s3
  %s6 = scalar_select 0, %s5, %s3
  $region1: #{tpu_custom_call.1} parent=0
    #allocation2 [shape = 'u8[16384]{0}', space=vmem, size = 0x4000, scoped, tag = 'input window, operand 0']
    #allocation3 [shape = 's32[2]{0}', space=sflag, size = 0x8, scoped, tag = 'scoped memory for tpu_custom_call.1']
    #allocation4 [shape = 's32[2]{0}', space=sflag, size = 0x8, scoped, tag = 'scoped memory for tpu_custom_call.1']
    #allocation5 [shape = 'u8[16384]{0}', space=vmem, size = 0x4000, scoped, tag = 'input window, operand 1']
    #allocation6 [shape = 's32[2]{0}', space=sflag, size = 0x8, scoped, tag = 'scoped memory for tpu_custom_call.1']
    #allocation7 [shape = 'u8[4096]{0}', space=vmem, size = 0x1000, scoped, tag = 'output window, operand 0']
    %7 = vsyncpa [#allocation3], 0
    %s8 = scalar_lea.sflag [#allocation3], 1
    %9 = vsyncpa %s8, 0
    %10 = vsyncpa [#allocation6], 0
    %s11 = scalar_lea.sflag [#allocation6], 1
    %12 = vsyncpa %s11, 0
    %13 = vsyncpa [#allocation4], 0
    %s14 = scalar_lea.sflag [#allocation4], 1
    %15 = vsyncpa %s14, 0
    loop: start=0, step=1, limit=4
    $region2: #{tpu_custom_call.1} parent=1 // loop_pre_header
      _
    $region3: #{tpu_custom_call.1} parent=1 // loop_header
      %s17 = sphi 0, %s21
      %p18 = scmp.ge.s32.totalorder %s17, 4
      %s24 = sphi 0, %s36
      %s25 = sphi 0, %s32
      %s26 = sphi 0, %s24
      %s27 = sphi 0, %s25
      %s28 = sphi 0, %s26
      %s29 = sphi 0, %s27
      %s41 = sphi 0, %s43
      %s44 = sphi 0, %s41
      %s45 = sphi 0, %s44
      %s61 = sphi 0, %s45
      %s67 = sphi 0, %s69
      %s70 = sphi 0, %s67
      %s71 = sphi 0, %s70
      %s87 = sphi 0, %s71
      %s95 = sphi 0, %s97
      %s98 = sphi 0, %s95
      %s99 = sphi 0, %s98
      %s115 = sphi 0, %s99
    $region4: #{tpu_custom_call.1} parent=1 // loop_header_branch
      %20 = sbr.rel (%p18) target = $region8
    $region5: #{tpu_custom_call.1} parent=1 // loop_body
      %s22 = ssub.s32 %s17, 1
      %s23 = ssub.s32 %s17, 2
      %s30 = sadd.s32 1, %s25
      %p31 = scmp.ge.s32.totalorder %s30, 1
      %s32 = scalar_select %p31, 0, %s30
      %s33 = sadd.s32 1, %s24
      %s34 = scalar_select %p31, %s33, %s24
      %p35 = scmp.ge.s32.totalorder %s34, 2
      %s36 = scalar_select %p35, 0, %s34
      %s37 = ssub.s32 %s24, %s36
      %s38 = ssub.s32 %s25, %s32
      %s39 = sor.u32 %s37, %s38
      %p40 = scmp.eq.s32.totalorder %s39, 0
      %s42 = sadd.s32 %s41, 1
      %s43 = scalar_select %p40, %s41, %s42
      %p46 = pneg %p40
      %p47 = scmp.eq.s32.totalorder %s17, 1
      %p48 = por %p46, %p47
      %p49 = scmp.ne.s32.totalorder %s41, %s44
      %p50 = scmp.eq.s32.totalorder %s17, 0
      %p51 = por %p49, %p50
      %p52 = scmp.ne.s32.totalorder %s41, %s44
      %p53 = scmp.eq.s32.totalorder %s22, 1
      %p54 = por %p52, %p53
      %p55 = scmp.ne.s32.totalorder %s44, %s45
      %p56 = scmp.eq.s32.totalorder %s22, 0
      %p57 = por %p55, %p56
      %p58 = scmp.ne.s32.totalorder %s44, %s45
      %p59 = scmp.eq.s32.totalorder %s23, 1
      %p60 = por %p58, %p59
      %p62 = scmp.ne.s32.totalorder %s45, %s61
      %p63 = scmp.eq.s32.totalorder %s23, 0
      %p64 = por %p62, %p63
      %s65 = ssub.s32 %s24, %s36
      %p66 = scmp.eq.s32.totalorder %s65, 0
      %s68 = sadd.s32 %s67, 1
      %s69 = scalar_select %p66, %s67, %s68
      %p72 = pneg %p66
      %p73 = scmp.eq.s32.totalorder %s17, 1
      %p74 = por %p72, %p73
      %p75 = scmp.ne.s32.totalorder %s67, %s70
      %p76 = scmp.eq.s32.totalorder %s17, 0
      %p77 = por %p75, %p76
      %p78 = scmp.ne.s32.totalorder %s67, %s70
      %p79 = scmp.eq.s32.totalorder %s22, 1
      %p80 = por %p78, %p79
      %p81 = scmp.ne.s32.totalorder %s70, %s71
      %p82 = scmp.eq.s32.totalorder %s22, 0
      %p83 = por %p81, %p82
      %p84 = scmp.ne.s32.totalorder %s70, %s71
      %p85 = scmp.eq.s32.totalorder %s23, 1
      %p86 = por %p84, %p85
      %p88 = scmp.ne.s32.totalorder %s71, %s87
      %p89 = scmp.eq.s32.totalorder %s23, 0
      %p90 = por %p88, %p89
      %s91 = ssub.s32 %s24, %s36
      %s92 = ssub.s32 %s25, %s32
      %s93 = sor.u32 %s91, %s92
      %p94 = scmp.eq.s32.totalorder %s93, 0
      %s96 = sadd.s32 %s95, 1
      %s97 = scalar_select %p94, %s95, %s96
      %p100 = pneg %p94
      %p101 = scmp.eq.s32.totalorder %s17, 1
      %p102 = por %p100, %p101
      %p103 = scmp.ne.s32.totalorder %s95, %s98
      %p104 = scmp.eq.s32.totalorder %s17, 0
      %p105 = por %p103, %p104
      %p106 = scmp.ne.s32.totalorder %s95, %s98
      %p107 = scmp.eq.s32.totalorder %s22, 1
      %p108 = por %p106, %p107
      %p109 = scmp.ne.s32.totalorder %s98, %s99
      %p110 = scmp.eq.s32.totalorder %s22, 0
      %p111 = por %p109, %p110
      %p112 = scmp.ne.s32.totalorder %s98, %s99
      %p113 = scmp.eq.s32.totalorder %s23, 1
      %p114 = por %p112, %p113
      %p116 = scmp.ne.s32.totalorder %s99, %s115
      %p117 = scmp.eq.s32.totalorder %s23, 0
      %p118 = por %p116, %p117
      %p119 = scmp.le.s32.totalorder 1, %s17
      %p120 = scmp.lt.s32.totalorder %s17, 3
      %p121 = pnand %p119, %p120
      %p122 = pneg %p121
      // Predicated region
      $region9: #{tpu_custom_call.1} parent=5 // pred_check
        _
      $region10: #{tpu_custom_call.1} parent=5 // pred_check_branch
        %124 = sbr.rel (%p121) target = $region12
      $region11: #{tpu_custom_call.1} parent=5 // pred_region
        %s125 = ssub.s32 %s17, 1
      $region12: #{tpu_custom_call.1} parent=5 // pred_fallthru
        _
      %p126 = scmp.lt.s32.totalorder %s17, 2
      // Predicated region
      $region13: #{tpu_custom_call.1} parent=5 // pred_check
        %p127 = pneg %p126
      $region14: #{tpu_custom_call.1} parent=5 // pred_check_branch
        %129 = sbr.rel (%p127) target = $region16
      $region15: #{tpu_custom_call.1} parent=5 // pred_region
        // Predicated region
        $region17: #{tpu_custom_call.1} parent=15 // pred_check
          %p130 = pneg %p51
        $region18: #{tpu_custom_call.1} parent=15 // pred_check_branch
          %132 = sbr.rel (%p130) target = $region20
        $region19: #{tpu_custom_call.1} parent=15 // pred_region
          %s133 = sand.u32 %s41, 1
          %s134 = scalar_lea.sflag [#allocation3], %s133
          %s135 = sand.u32 %s41, 1
          %s136 = smul.addr %s135, 16
          %s137 = scalar_lea.vmem [#allocation2], %s136
          %s139 = ssub.s32 256, 256
          %140 = vsyncadd %s134, %s139
          %s141 = smul.addr %s24, 4
          %s142 = sadd.s32 %s25, %s141
          %s143 = smul.addr %s142, 64
          %s144 = scalar_lea.hbm %s0, %s143
          %s145 = sshll.u32 %s137, 4
          %s146 = int_to_ptr.vmem [resolvable:$true] %s145
          %151 = dma.hbm_to_vmem [thread:$0]  %s144, 256, %s146, %s134, 64, 64, 4
        $region20: #{tpu_custom_call.1} parent=15 // pred_fallthru
          _
        // Predicated region
        $region21: #{tpu_custom_call.1} parent=15 // pred_check
          %p152 = pneg %p77
        $region22: #{tpu_custom_call.1} parent=15 // pred_check_branch
          %154 = sbr.rel (%p152) target = $region24
        $region23: #{tpu_custom_call.1} parent=15 // pred_region
          %s155 = sand.u32 %s67, 1
          %s156 = scalar_lea.sflag [#allocation6], %s155
          %s157 = sand.u32 %s67, 1
          %s158 = smul.addr %s157, 16
          %s159 = scalar_lea.vmem [#allocation5], %s158
          %s161 = ssub.s32 256, 256
          %162 = vsyncadd %s156, %s161
          %s163 = smul.addr %s24, 4
          %s164 = smul.addr %s163, 64
          %s165 = scalar_lea.hbm %s1, %s164
          %s166 = sshll.u32 %s159, 4
          %s167 = int_to_ptr.vmem [resolvable:$true] %s166
          %172 = dma.hbm_to_vmem [thread:$0]  %s165, 256, %s167, %s156, 64, 64, 4
        $region24: #{tpu_custom_call.1} parent=15 // pred_fallthru
          _
      $region16: #{tpu_custom_call.1} parent=5 // pred_fallthru
        _
      %p173 = scmp.le.s32.totalorder 1, %s17
      %p174 = scmp.lt.s32.totalorder %s17, 3
      %p175 = pnand %p173, %p174
      %p176 = pneg %p175
      // Predicated region
      $region25: #{tpu_custom_call.1} parent=5 // pred_check
        _
      $region26: #{tpu_custom_call.1} parent=5 // pred_check_branch
        %178 = sbr.rel (%p175) target = $region28
      $region27: #{tpu_custom_call.1} parent=5 // pred_region
        %s179 = ssub.s32 %s17, 1
        %s180 = sand.u32 %s44, 1
        %s181 = scalar_lea.sflag [#allocation3], %s180
        %s182 = sand.u32 %s44, 1
        %s183 = smul.addr %s182, 16
        %s184 = scalar_lea.vmem [#allocation2], %s183
        // Predicated region
        $region29: #{tpu_custom_call.1} parent=27 // pred_check
          %p185 = pneg %p57
        $region30: #{tpu_custom_call.1} parent=27 // pred_check_branch
          %187 = sbr.rel (%p185) target = $region32
        $region31: #{tpu_custom_call.1} parent=27 // pred_region
          %188 = dma.done %s181, 256
        $region32: #{tpu_custom_call.1} parent=27 // pred_fallthru
          _
        %s189 = sand.u32 %s70, 1
        %s190 = scalar_lea.sflag [#allocation6], %s189
        %s191 = sand.u32 %s70, 1
        %s192 = smul.addr %s191, 16
        %s193 = scalar_lea.vmem [#allocation5], %s192
        // Predicated region
        $region33: #{tpu_custom_call.1} parent=27 // pred_check
          %p194 = pneg %p83
        $region34: #{tpu_custom_call.1} parent=27 // pred_check_branch
          %196 = sbr.rel (%p194) target = $region36
        $region35: #{tpu_custom_call.1} parent=27 // pred_region
          %197 = dma.done %s190, 256
        $region36: #{tpu_custom_call.1} parent=27 // pred_fallthru
          _
        %s198 = sand.u32 %s44, 1
        %s199 = scalar_lea.sflag [#allocation3], %s198
        %s200 = sand.u32 %s44, 1
        %s201 = smul.addr %s200, 16
        %s202 = scalar_lea.vmem [#allocation2], %s201
        %p203 = pneg %p57
        %p204 = pneg %p54
        %s205 = sand.u32 %s70, 1
        %s206 = scalar_lea.sflag [#allocation6], %s205
        %s207 = sand.u32 %s70, 1
        %s208 = smul.addr %s207, 16
        %s209 = scalar_lea.vmem [#allocation5], %s208
        %p210 = pneg %p83
        %p211 = pneg %p80
        %p212 = pneg %p111
        %p213 = pneg %p108
        %s214 = sand.u32 %s98, 1
        %s215 = scalar_lea.sflag [#allocation4], %s214
        %s216 = sand.u32 %s98, 1
        %s217 = smul.addr %s216, 4
        %s218 = scalar_lea.vmem [#allocation7], %s217
        %v220 = vld [vmem:[%s184] sm:$0xf]
        %v221 = vld [vmem:[%s193] sm:$0xf]
        %vm222 = vcmask 64512
        %v224 = vsel %vm222, %v220, 0
        %vm226 = vcmask 1043456
        %v228 = vsel %vm226, %v221, 0
        %230 = vmatprep.subr.bf16.mxu0 0
        %231 = vmatpush1.bf16.msra.mxu0 %v228
        %232 = vmatprep.subr.bf16.mxu0 0
        %233 = vmatpush1.bf16.msra.mxu0 0
        %234 = vmatprep.subr.bf16.mxu0 0
        %235 = vmatpush1.bf16.msra.mxu0 0
        %236 = vmatprep.subr.bf16.mxu0 0
        %237 = vmatpush1.bf16.msra.mxu0 0
        %238 = vmatprep.subr.bf16.mxu0 0
        %239 = vmatpush1.bf16.msra.mxu0 0
        %240 = vmatprep.subr.bf16.mxu0 0
        %241 = vmatpush1.bf16.msra.mxu0 0
        %242 = vmatprep.subr.bf16.mxu0 0
        %243 = vmatpush1.bf16.msra.mxu0 0
        %244 = vmatprep.subr.bf16.mxu0 0
        %245 = vmatpush1.bf16.msra.mxu0 0
        %246 = vmatprep.subr.bf16.mxu0 0
        %247 = vmatpush1.bf16.msra.mxu0 0
        %248 = vmatprep.subr.bf16.mxu0 0
        %249 = vmatpush1.bf16.msra.mxu0 0
        %250 = vmatprep.subr.bf16.mxu0 0
        %251 = vmatpush1.bf16.msra.mxu0 0
        %252 = vmatprep.subr.bf16.mxu0 0
        %253 = vmatpush1.bf16.msra.mxu0 0
        %254 = vmatprep.subr.bf16.mxu0 0
        %255 = vmatpush1.bf16.msra.mxu0 0
        %256 = vmatprep.subr.bf16.mxu0 0
        %257 = vmatpush1.bf16.msra.mxu0 0
        %258 = vmatprep.subr.bf16.mxu0 0
        %259 = vmatpush1.bf16.msra.mxu0 0
        %260 = vmatprep.subr.bf16.mxu0 0
        %261 = vmatpush1.bf16.msra.mxu0 0
        %262 = vmatprep.mubr.bf16.mxu0 0
        %263 = vmatmul.mubr.bf16.gmra.mrb[0].mxu0 %v224
        %v264 = vpop.f32.mrb[0].mxu0
        %v265 = vadd.f32 0.0, %v264
        %v266 = vpop.f32.mrb[0].mxu0
        %v267 = vpop.f32.mrb[0].mxu0
        %v268 = vpop.f32.mrb[0].mxu0
        %269 = vdwg.mxu0
        %v270 = vand.u32 2147483647, %v265
        %v271 = vsel %vm222, %v270, -inf
        %272 = vmax.xlane.f32.xlu0 %v271
        %v273 = vpop.xlane.xlu0 %272
        %v274 = vmax.f32 %v273, 1.1754944e-38
        %v275 = vlog2.pop %v274
        %v276 = vmul.f32 %v275, 0.6931472
        %v277 = vrcp.pop 0.6931472
        %v278 = vmul.f32 %v276, %v277
        %v279 = vceil.f32 %v278
        %v280 = vsub.f32 7.0, %v279
        %v281 = vpow.pop %v280
        %v282 = vsub.f32 %v279, 7.0
        %v283 = vpow.pop %v282
        %v284 = vmul.f32 %v265, %v281
        %v285 = vround.ne.pseudo %v284
        %v286 = vmax.f32 %v285, -128.0
        %v287 = vmin.f32 %v286, 127.0
        %v288 = vmul.f32 %v287, %v283
        %v289 = vpack.c.bf16 %v288, %v288
        %s290 = scalar_lea.vmem %s184, 4 [#allocation2]
        %v291 = vld [vmem:[%s290] sm:$0xf]
        %s292 = scalar_lea.vmem %s193, 4 [#allocation5]
        %v293 = vld [vmem:[%s292] sm:$0xf]
        %v295 = vsel %vm222, %v291, 0
        %v298 = vsel %vm226, %v293, 0
        %300 = vmatprep.subr.bf16.mxu0 0
        %301 = vmatpush1.bf16.msra.mxu0 %v298
        %302 = vmatprep.subr.bf16.mxu0 0
        %303 = vmatpush1.bf16.msra.mxu0 0
        %304 = vmatprep.subr.bf16.mxu0 0
        %305 = vmatpush1.bf16.msra.mxu0 0
        %306 = vmatprep.subr.bf16.mxu0 0
        %307 = vmatpush1.bf16.msra.mxu0 0
        %308 = vmatprep.subr.bf16.mxu0 0
        %309 = vmatpush1.bf16.msra.mxu0 0
        %310 = vmatprep.subr.bf16.mxu0 0
        %311 = vmatpush1.bf16.msra.mxu0 0
        %312 = vmatprep.subr.bf16.mxu0 0
        %313 = vmatpush1.bf16.msra.mxu0 0
        %314 = vmatprep.subr.bf16.mxu0 0
        %315 = vmatpush1.bf16.msra.mxu0 0
        %316 = vmatprep.subr.bf16.mxu0 0
        %317 = vmatpush1.bf16.msra.mxu0 0
        %318 = vmatprep.subr.bf16.mxu0 0
        %319 = vmatpush1.bf16.msra.mxu0 0
        %320 = vmatprep.subr.bf16.mxu0 0
        %321 = vmatpush1.bf16.msra.mxu0 0
        %322 = vmatprep.subr.bf16.mxu0 0
        %323 = vmatpush1.bf16.msra.mxu0 0
        %324 = vmatprep.subr.bf16.mxu0 0
        %325 = vmatpush1.bf16.msra.mxu0 0
        %326 = vmatprep.subr.bf16.mxu0 0
        %327 = vmatpush1.bf16.msra.mxu0 0
        %328 = vmatprep.subr.bf16.mxu0 0
        %329 = vmatpush1.bf16.msra.mxu0 0
        %330 = vmatprep.subr.bf16.mxu0 0
        %331 = vmatpush1.bf16.msra.mxu0 0
        %332 = vmatprep.mubr.bf16.mxu0 0
        %333 = vmatmul.mubr.bf16.gmra.mrb[0].mxu0 %v295
        %v334 = vpop.f32.mrb[0].mxu0
        %v335 = vadd.f32 0.0, %v334
        %v336 = vpop.f32.mrb[0].mxu0
        %v337 = vpop.f32.mrb[0].mxu0
        %v338 = vpop.f32.mrb[0].mxu0
        %339 = vdwg.mxu0
        %v340 = vand.u32 2147483647, %v335
        %v341 = vsel %vm222, %v340, -inf
        %342 = vmax.xlane.f32.xlu0 %v341
        %v343 = vpop.xlane.xlu0 %342
        %v344 = vmax.f32 %v343, 1.1754944e-38
        %v345 = vlog2.pop %v344
        %v346 = vmul.f32 %v345, 0.6931472
        %v347 = vmul.f32 %v346, %v277
        %v348 = vceil.f32 %v347
        %v349 = vsub.f32 7.0, %v348
        %v350 = vpow.pop %v349
        %v351 = vsub.f32 %v348, 7.0
        %v352 = vpow.pop %v351
        %v353 = vmul.f32 %v335, %v350
        %v354 = vround.ne.pseudo %v353
        %v355 = vmax.f32 %v354, -128.0
        %v356 = vmin.f32 %v355, 127.0
        %v357 = vmul.f32 %v356, %v352
        %v358 = vpack.c.bf16 %v357, %v357
        %s359 = scalar_lea.vmem %s184, 8 [#allocation2]
        %v360 = vld [vmem:[%s359] sm:$0xf]
        %s361 = scalar_lea.vmem %s193, 8 [#allocation5]
        %v362 = vld [vmem:[%s361] sm:$0xf]
        %v364 = vsel %vm222, %v360, 0
        %v367 = vsel %vm226, %v362, 0
        %369 = vmatprep.subr.bf16.mxu0 0
        %370 = vmatpush1.bf16.msra.mxu0 %v367
        %371 = vmatprep.subr.bf16.mxu0 0
        %372 = vmatpush1.bf16.msra.mxu0 0
        %373 = vmatprep.subr.bf16.mxu0 0
        %374 = vmatpush1.bf16.msra.mxu0 0
        %375 = vmatprep.subr.bf16.mxu0 0
        %376 = vmatpush1.bf16.msra.mxu0 0
        %377 = vmatprep.subr.bf16.mxu0 0
        %378 = vmatpush1.bf16.msra.mxu0 0
        %379 = vmatprep.subr.bf16.mxu0 0
        %380 = vmatpush1.bf16.msra.mxu0 0
        %381 = vmatprep.subr.bf16.mxu0 0
        %382 = vmatpush1.bf16.msra.mxu0 0
        %383 = vmatprep.subr.bf16.mxu0 0
        %384 = vmatpush1.bf16.msra.mxu0 0
        %385 = vmatprep.subr.bf16.mxu0 0
        %386 = vmatpush1.bf16.msra.mxu0 0
        %387 = vmatprep.subr.bf16.mxu0 0
        %388 = vmatpush1.bf16.msra.mxu0 0
        %389 = vmatprep.subr.bf16.mxu0 0
        %390 = vmatpush1.bf16.msra.mxu0 0
        %391 = vmatprep.subr.bf16.mxu0 0
        %392 = vmatpush1.bf16.msra.mxu0 0
        %393 = vmatprep.subr.bf16.mxu0 0
        %394 = vmatpush1.bf16.msra.mxu0 0
        %395 = vmatprep.subr.bf16.mxu0 0
        %396 = vmatpush1.bf16.msra.mxu0 0
        %397 = vmatprep.subr.bf16.mxu0 0
        %398 = vmatpush1.bf16.msra.mxu0 0
        %399 = vmatprep.subr.bf16.mxu0 0
        %400 = vmatpush1.bf16.msra.mxu0 0
        %401 = vmatprep.mubr.bf16.mxu0 0
        %402 = vmatmul.mubr.bf16.gmra.mrb[0].mxu0 %v364
        %v403 = vpop.f32.mrb[0].mxu0
        %v404 = vadd.f32 0.0, %v403
        %v405 = vpop.f32.mrb[0].mxu0
        %v406 = vpop.f32.mrb[0].mxu0
        %v407 = vpop.f32.mrb[0].mxu0
        %408 = vdwg.mxu0
        %v409 = vand.u32 2147483647, %v404
        %v410 = vsel %vm222, %v409, -inf
        %411 = vmax.xlane.f32.xlu0 %v410
        %v412 = vpop.xlane.xlu0 %411
        %v413 = vmax.f32 %v412, 1.1754944e-38
        %v414 = vlog2.pop %v413
        %v415 = vmul.f32 %v414, 0.6931472
        %v416 = vmul.f32 %v415, %v277
        %v417 = vceil.f32 %v416
        %v418 = vsub.f32 7.0, %v417
        %v419 = vpow.pop %v418
        %v420 = vsub.f32 %v417, 7.0
        %v421 = vpow.pop %v420
        %v422 = vmul.f32 %v404, %v419
        %v423 = vround.ne.pseudo %v422
        %v424 = vmax.f32 %v423, -128.0
        %v425 = vmin.f32 %v424, 127.0
        %v426 = vmul.f32 %v425, %v421
        %v427 = vpack.c.bf16 %v426, %v426
        %s428 = scalar_lea.vmem %s184, 12 [#allocation2]
        %v429 = vld [vmem:[%s428] sm:$0xf]
        %s430 = scalar_lea.vmem %s193, 12 [#allocation5]
        %v431 = vld [vmem:[%s430] sm:$0xf]
        %v433 = vsel %vm222, %v429, 0
        %v436 = vsel %vm226, %v431, 0
        %438 = vmatprep.subr.bf16.mxu0 0
        %439 = vmatpush1.bf16.msra.mxu0 %v436
        %440 = vmatprep.subr.bf16.mxu0 0
        %441 = vmatpush1.bf16.msra.mxu0 0
        %442 = vmatprep.subr.bf16.mxu0 0
        %443 = vmatpush1.bf16.msra.mxu0 0
        %444 = vmatprep.subr.bf16.mxu0 0
        %445 = vmatpush1.bf16.msra.mxu0 0
        %446 = vmatprep.subr.bf16.mxu0 0
        %447 = vmatpush1.bf16.msra.mxu0 0
        %448 = vmatprep.subr.bf16.mxu0 0
        %449 = vmatpush1.bf16.msra.mxu0 0
        %450 = vmatprep.subr.bf16.mxu0 0
        %451 = vmatpush1.bf16.msra.mxu0 0
        %452 = vmatprep.subr.bf16.mxu0 0
        %453 = vmatpush1.bf16.msra.mxu0 0
        %454 = vmatprep.subr.bf16.mxu0 0
        %455 = vmatpush1.bf16.msra.mxu0 0
        %456 = vmatprep.subr.bf16.mxu0 0
        %457 = vmatpush1.bf16.msra.mxu0 0
        %458 = vmatprep.subr.bf16.mxu0 0
        %459 = vmatpush1.bf16.msra.mxu0 0
        %460 = vmatprep.subr.bf16.mxu0 0
        %461 = vmatpush1.bf16.msra.mxu0 0
        %462 = vmatprep.subr.bf16.mxu0 0
        %463 = vmatpush1.bf16.msra.mxu0 0
        %464 = vmatprep.subr.bf16.mxu0 0
        %465 = vmatpush1.bf16.msra.mxu0 0
        %466 = vmatprep.subr.bf16.mxu0 0
        %467 = vmatpush1.bf16.msra.mxu0 0
        %468 = vmatprep.subr.bf16.mxu0 0
        %469 = vmatpush1.bf16.msra.mxu0 0
        %470 = vmatprep.mubr.bf16.mxu0 0
        %471 = vmatmul.mubr.bf16.gmra.mrb[0].mxu0 %v433
        %v472 = vpop.f32.mrb[0].mxu0
        %v473 = vadd.f32 0.0, %v472
        %v474 = vpop.f32.mrb[0].mxu0
        %v475 = vpop.f32.mrb[0].mxu0
        %v476 = vpop.f32.mrb[0].mxu0
        %477 = vdwg.mxu0
        %v478 = vand.u32 2147483647, %v473
        %v479 = vsel %vm222, %v478, -inf
        %480 = vmax.xlane.f32.xlu0 %v479
        %v481 = vpop.xlane.xlu0 %480
        %v482 = vmax.f32 %v481, 1.1754944e-38
        %v483 = vlog2.pop %v482
        %v484 = vmul.f32 %v483, 0.6931472
        %v485 = vmul.f32 %v484, %v277
        %v486 = vceil.f32 %v485
        %v487 = vsub.f32 7.0, %v486
        %v488 = vpow.pop %v487
        %v489 = vsub.f32 %v486, 7.0
        %v490 = vpow.pop %v489
        %v491 = vmul.f32 %v473, %v488
        %v492 = vround.ne.pseudo %v491
        %v493 = vmax.f32 %v492, -128.0
        %v494 = vmin.f32 %v493, 127.0
        %v495 = vmul.f32 %v494, %v490
        %v496 = vpack.c.bf16 %v495, %v495
        %498 = vrot.lane.b32.xlu0 %v358, 8
        %v499 = vpop.permute.xlu0 %498
        %501 = vrot.lane.b32.xlu0 %v427, 16
        %v502 = vpop.permute.xlu0 %501
        %504 = vrot.lane.b32.xlu0 %v496, 24
        %v505 = vpop.permute.xlu0 %504
        %v508 = vsel %vm222, %v289, %v499
        %vm509 = vcmask 130048
        %v511 = vsel %vm509, %v508, %v502
        %vm512 = vcmask 195584
        %v514 = vsel %vm512, %v511, %v505
        %vm516 = vcmask 257024
        %517 = vst.msk [vmem:[%s218] sm:$0xf] %vm516, %v514
        %s518 = sand.u32 %s98, 1
        %s519 = scalar_lea.sflag [#allocation4], %s518
        %s520 = sand.u32 %s98, 1
        %s521 = smul.addr %s520, 4
        %s522 = scalar_lea.vmem [#allocation7], %s521
        // Predicated region
        $region37: #{tpu_custom_call.1} parent=27 // pred_check
          %p523 = pneg %p108
        $region38: #{tpu_custom_call.1} parent=27 // pred_check_branch
          %525 = sbr.rel (%p523) target = $region40
        $region39: #{tpu_custom_call.1} parent=27 // pred_region
          %s527 = ssub.s32 64, 64
          %528 = vsyncadd %s519, %s527
          %s529 = sadd.s32 %s27, %s26
          %s530 = smul.addr %s529, 64
          %s531 = scalar_lea.hbm %s2, %s530
          %s533 = sshll.u32 %s522, 4
          %s534 = int_to_ptr.vmem [resolvable:$true] %s533
          %536 = dma.vmem_to_hbm [thread:$0]  %s534, 64, %s531, %s519
        $region40: #{tpu_custom_call.1} parent=27 // pred_fallthru
          _
      $region28: #{tpu_custom_call.1} parent=5 // pred_fallthru
        _
      %p537 = scmp.le.s32.totalorder 2, %s17
      // Predicated region
      $region41: #{tpu_custom_call.1} parent=5 // pred_check
        %p538 = pneg %p537
      $region42: #{tpu_custom_call.1} parent=5 // pred_check_branch
        %540 = sbr.rel (%p538) target = $region44
      $region43: #{tpu_custom_call.1} parent=5 // pred_region
        %s541 = ssub.s32 %s17, 2
        // Predicated region
        $region45: #{tpu_custom_call.1} parent=43 // pred_check
          %p542 = pneg %p114
        $region46: #{tpu_custom_call.1} parent=43 // pred_check_branch
          %544 = sbr.rel (%p542) target = $region48
        $region47: #{tpu_custom_call.1} parent=43 // pred_region
          %s545 = sand.u32 %s99, 1
          %s546 = scalar_lea.sflag [#allocation4], %s545
          %s547 = sand.u32 %s99, 1
          %s548 = smul.addr %s547, 4
          %s549 = scalar_lea.vmem [#allocation7], %s548
          %550 = dma.done %s546, 64
        $region48: #{tpu_custom_call.1} parent=43 // pred_fallthru
          _
      $region44: #{tpu_custom_call.1} parent=5 // pred_fallthru
        _
    $region6: #{tpu_custom_call.1} parent=1 // loop_footer
      %s21 = sadd.s32 1, %s17
    $region7: #{tpu_custom_call.1} parent=1 // loop_footer_branch
      %16 = sbr.rel target = $region3
    $region8: #{tpu_custom_call.1} parent=1 // loop_exit
      _
    %551 = vsyncpa [#allocation3], 1
    %s552 = scalar_lea.sflag [#allocation3], 1
    %553 = vsyncpa %s552, 1
    %554 = vsyncpa [#allocation6], 1
    %s555 = scalar_lea.sflag [#allocation6], 1
    %556 = vsyncpa %s555, 1
    %557 = vsyncpa [#allocation4], 1
    %s558 = scalar_lea.sflag [#allocation4], 1
    %559 = vsyncpa %s558, 1

</llo_original>
